<compile_context>
chip_gen: v7x
topology: tpu7x:2x2x1
jax: 0.10.0
libtpu: 0.0.40
codegen_flags: <defaults>
</compile_context>

<pallas_src>
import functools

import jax
import jax.numpy as jnp
from jax.experimental import pallas as pl
from jax.experimental.pallas import tpu as pltpu


def _bahdanau_kernel(feat_ref, hwh_ref, wxT_ref, v_ref, z_ref, a_ref,
                     *, compute_dtype):
    # Per-grid-step views:
    #   feat_ref : (TB, L, E)  features for TB batch rows
    #   hwh_ref  : (TB, E)     precomputed hidden @ Wh.T + bWh + bWx
    #   wxT_ref  : (E, E)      pre-transposed Wx weight (x @ WxT, no in-kernel .T)
    #   v_ref    : (1, E)      V weight row (V bias cancels in softmax -> dropped)
    #   z_ref    : (TB, E)     context vectors
    #   a_ref    : (TB, L)     attention weights, lane-dense
    tb, l, e = feat_ref.shape

    f3 = feat_ref[...]                                    # (TB, L, E) f32
    # Layout-preserving flatten (L is a sublane multiple), feeds one MXU matmul.
    f2 = f3.reshape(tb * l, e)

    if compute_dtype == jnp.float32:
        x_wx = jnp.dot(f2, wxT_ref[...], preferred_element_type=jnp.float32)
    else:
        # v6e / v7x: bf16 MXU inputs, f32 accumulation.
        x_wx = jnp.dot(f2.astype(compute_dtype),
                       wxT_ref[...].astype(compute_dtype),
                       preferred_element_type=jnp.float32)
    x_wx = x_wx.reshape(tb, l, e)

    # tanh(x @ Wx.T + bWx + h @ Wh.T + bWh); hidden projection + biases hoisted.
    lam = jnp.tanh(x_wx + hwh_ref[...][:, None, :])       # (TB, L, E) f32

    # V score: VPU multiply + XLU cross-lane reduce over E (E < 128 -> not MXU).
    scores = jnp.sum(lam * v_ref[...][None], axis=-1)     # (TB, L)

    # Softmax over the sequence (last / lane) axis, numerically safe.
    m = jnp.max(scores, axis=-1, keepdims=True)
    ex = jnp.exp(scores - m)
    denom = jnp.sum(ex, axis=-1, keepdims=True)
    inv = pl.reciprocal(denom, approx=True)               # EUP slot
    inv = inv * (2.0 - denom * inv)                       # one Newton step -> f32 accuracy
    alphas = ex * inv                                     # (TB, L)

    a_ref[...] = alphas
    # Context: sum_L alphas * features -> (TB, E)
    z_ref[...] = jnp.sum(alphas[:, :, None] * f3, axis=1)


def _choose_batch_block(B, L, target_rows=1024):
    """Largest multiple-of-8 batch block that divides B, keeps TB*L bounded
    (VMEM / double-buffering budget, important on v7x's 64 MiB) and leaves
    >= 2 grid steps so both v7x TensorCores get work. Falls back to the whole
    batch (block dim == array dim is always layout-legal)."""
    cands = [tb for tb in range(8, B, 8) if B % tb == 0 and tb * L <= target_rows]
    return max(cands) if cands else B


def bahdanau_forward(features, hidden, params, *, compute_dtype=jnp.float32,
                     batch_block=None):
    B, L, E = features.shape
    wx_w, wx_b, wh_w, wh_b, v_w, v_b = params
    del v_b  # same constant added to every score of a row -> cancels in softmax

    TB = batch_block if batch_block is not None else _choose_batch_block(B, L)
    assert B % TB == 0, "batch block must divide the batch"

    # Hoisted, per-call constant / degenerate-M work:
    wxT = jnp.asarray(wx_w).T                              # (E, E), done once
    hwh = hidden @ wh_w.T + wh_b + wx_b                    # (B, E) hidden proj + both biases

    grid_spec = pltpu.PrefetchScalarGridSpec(
        num_scalar_prefetch=0,
        grid=(B // TB,),
        in_specs=[
            pl.BlockSpec((TB, L, E), lambda b: (b, 0, 0)),   # features
            pl.BlockSpec((TB, E), lambda b: (b, 0)),         # hidden projection + biases
            pl.BlockSpec((E, E), lambda b: (0, 0)),          # Wx.T
            pl.BlockSpec((1, E), lambda b: (0, 0)),          # V weight row
        ],
        out_specs=[
            pl.BlockSpec((TB, E), lambda b: (b, 0)),         # z
            pl.BlockSpec((TB, L), lambda b: (b, 0)),         # alphas (lane-dense)
        ],
    )

    kernel = functools.partial(_bahdanau_kernel, compute_dtype=compute_dtype)
    z, alphas = pl.pallas_call(
        kernel,
        out_shape=(jax.ShapeDtypeStruct((B, E), jnp.float32),
                   jax.ShapeDtypeStruct((B, L), jnp.float32)),
        grid_spec=grid_spec,
        compiler_params=pltpu.CompilerParams(
            dimension_semantics=("parallel",)),
    )(features, hwh, wxT, v_w)

    # Match the PyTorch module's return shapes: z (B, E), alphas (B, L, 1).
    return z, alphas[..., None]


def bahdanau_ref(features, hidden, params):
    """Pure-JAX reference matching the PyTorch forward."""
    wx_w, wx_b, wh_w, wh_b, v_w, v_b = params
    h = hidden[:, None, :]                               # (B, 1, H)
    x_wx = features @ wx_w.T + wx_b                      # (B, L, E)
    h_wh = h @ wh_w.T + wh_b                             # (B, 1, E)
    lam = jnp.tanh(x_wx + h_wh)                          # (B, L, E)
    lam = lam @ v_w.T + v_b                              # (B, L, 1)
    alphas = jax.nn.softmax(lam, axis=1)                 # (B, L, 1)
    z = jnp.sum(alphas * features, axis=1)               # (B, E)
    return z, alphas


if __name__ == "__main__":
    B, L = 16, 8               # batch, sequence length (B=16 -> TB=8, grid of 2)
    E, H = 32, 32              # encoder_size, hidden_size

    key = jax.random.PRNGKey(0)
    kf, kh, k1, k2, k3, k4, k5, k6 = jax.random.split(key, 8)

    features = jax.random.normal(kf, (B, L, E), dtype=jnp.float32)
    hidden = jax.random.normal(kh, (B, H), dtype=jnp.float32)

    # nn.Linear shapes: weight (out, in), bias (out,).
    params = (
        jax.random.normal(k1, (E, E), dtype=jnp.float32) * 0.1,   # Wx.weight
        jax.random.normal(k2, (E,), dtype=jnp.float32) * 0.1,     # Wx.bias
        jax.random.normal(k3, (E, H), dtype=jnp.float32) * 0.1,   # Wh.weight
        jax.random.normal(k4, (E,), dtype=jnp.float32) * 0.1,     # Wh.bias
        jax.random.normal(k5, (1, E), dtype=jnp.float32) * 0.1,   # V.weight
        jax.random.normal(k6, (1,), dtype=jnp.float32) * 0.1,     # V.bias
    )

    z, alphas = bahdanau_forward(features, hidden, params)
    jax.block_until_ready((z, alphas))

    z_ref, a_ref = bahdanau_ref(features, hidden, params)
    assert jnp.allclose(z, z_ref, atol=1e-4, rtol=1e-4)
    assert jnp.allclose(alphas, a_ref, atol=1e-4, rtol=1e-4)

    print("KERNEL_OK")
</pallas_src>

<mosaic_0001>
module attributes {stable_mosaic.version = 11 : i64} {
  func.func @_bahdanau_kernel(%arg0: i32, %arg1: memref<8x8x32xf32, #tpu.memory_space<vmem>>, %arg2: memref<8x32xf32, #tpu.memory_space<vmem>>, %arg3: memref<32x32xf32, #tpu.memory_space<vmem>>, %arg4: memref<1x32xf32, #tpu.memory_space<vmem>>, %arg5: memref<8x32xf32, #tpu.memory_space<vmem>>, %arg6: memref<8x8xf32, #tpu.memory_space<vmem>>) attributes {dimension_semantics = [#tpu.dimension_semantics<parallel>], iteration_bounds = array<i64: 2>, scalar_prefetch = 0 : i64, scratch_operands = 0 : i64, tpu.core_type = #tpu.core_type<tc>, window_params = [{transform_indices = @transform_0, window_bounds = array<i64: 8, 8, 32>}, {transform_indices = @transform_1, window_bounds = array<i64: 8, 32>}, {pipeline_mode = #tpu.pipeline_mode<synchronous>, transform_indices = @transform_2, window_bounds = array<i64: 32, 32>}, {pipeline_mode = #tpu.pipeline_mode<synchronous>, transform_indices = @transform_3, window_bounds = array<i64: 1, 32>}, {transform_indices = @transform_4, window_bounds = array<i64: 8, 32>}, {transform_indices = @transform_5, window_bounds = array<i64: 8, 8>}]} {
    %c0 = arith.constant 0 : index
    %c0_0 = arith.constant 0 : index
    %c0_1 = arith.constant 0 : index
    %0 = vector.load %arg1[%c0, %c0_0, %c0_1] : memref<8x8x32xf32, #tpu.memory_space<vmem>>, vector<8x8x32xf32>
    %1 = vector.shape_cast %0 : vector<8x8x32xf32> to vector<64x32xf32>
    %c0_2 = arith.constant 0 : index
    %c0_3 = arith.constant 0 : index
    %2 = vector.load %arg3[%c0_2, %c0_3] : memref<32x32xf32, #tpu.memory_space<vmem>>, vector<32x32xf32>
    %cst = arith.constant dense<0.000000e+00> : vector<64x32xf32>
    %3 = tpu.matmul %1, %2, %cst {dimension_numbers = #tpu.dot_dimension_numbers<[1], [0], [0], [1], [0, 0, 1, 1], [], []>} : vector<64x32xf32>, vector<32x32xf32>, vector<64x32xf32> -> vector<64x32xf32>
    %4 = vector.shape_cast %3 : vector<64x32xf32> to vector<8x8x32xf32>
    %c0_4 = arith.constant 0 : index
    %c0_5 = arith.constant 0 : index
    %5 = vector.load %arg2[%c0_4, %c0_5] : memref<8x32xf32, #tpu.memory_space<vmem>>, vector<8x32xf32>
    %6 = vector.shape_cast %5 : vector<8x32xf32> to vector<8x1x32xf32>
    %7 = vector.broadcast %6 : vector<8x1x32xf32> to vector<8x8x32xf32>
    %8 = arith.addf %4, %7 : vector<8x8x32xf32>
    %9 = math.tanh %8 : vector<8x8x32xf32>
    %c0_6 = arith.constant 0 : index
    %c0_7 = arith.constant 0 : index
    %10 = vector.load %arg4[%c0_6, %c0_7] : memref<1x32xf32, #tpu.memory_space<vmem>>, vector<1x32xf32>
    %11 = vector.shape_cast %10 : vector<1x32xf32> to vector<1x1x32xf32>
    %12 = vector.broadcast %11 : vector<1x1x32xf32> to vector<8x8x32xf32>
    %13 = arith.mulf %9, %12 : vector<8x8x32xf32>
    %cst_8 = arith.constant dense<0.000000e+00> : vector<8x8xf32>
    %14 = vector.multi_reduction <add>, %13, %cst_8 [2] : vector<8x8x32xf32> to vector<8x8xf32>
    %cst_9 = arith.constant dense<0xFF800000> : vector<8xf32>
    %15 = vector.multi_reduction <maximumf>, %14, %cst_9 [1] : vector<8x8xf32> to vector<8xf32>
    %16 = vector.shape_cast %15 : vector<8xf32> to vector<8x1xf32>
    %17 = vector.broadcast %16 : vector<8x1xf32> to vector<8x8xf32>
    %18 = arith.subf %14, %17 : vector<8x8xf32>
    %19 = math.exp %18 : vector<8x8xf32>
    %cst_10 = arith.constant dense<0.000000e+00> : vector<8xf32>
    %20 = vector.multi_reduction <add>, %19, %cst_10 [1] : vector<8x8xf32> to vector<8xf32>
    %21 = vector.shape_cast %20 : vector<8xf32> to vector<8x1xf32>
    %22 = tpu.reciprocal %21 {approx = true} : vector<8x1xf32> -> vector<8x1xf32>
    %23 = arith.mulf %21, %22 : vector<8x1xf32>
    %cst_11 = arith.constant 2.000000e+00 : f32
    %24 = vector.broadcast %cst_11 : f32 to vector<8x1xf32>
    %25 = arith.subf %24, %23 : vector<8x1xf32>
    %26 = arith.mulf %22, %25 : vector<8x1xf32>
    %27 = vector.broadcast %26 : vector<8x1xf32> to vector<8x8xf32>
    %28 = arith.mulf %19, %27 : vector<8x8xf32>
    %c0_12 = arith.constant 0 : index
    %c0_13 = arith.constant 0 : index
    %29 = vector.load %arg6[%c0_12, %c0_13] : memref<8x8xf32, #tpu.memory_space<vmem>>, vector<8x8xf32>
    tpu.vector_store %arg6[%c0_12, %c0_13], %28 {strides = array<i32>} : memref<8x8xf32, #tpu.memory_space<vmem>>, vector<8x8xf32>,
    %30 = vector.shape_cast %28 : vector<8x8xf32> to vector<8x8x1xf32>
    %31 = vector.broadcast %30 : vector<8x8x1xf32> to vector<8x8x32xf32>
    %32 = arith.mulf %31, %0 : vector<8x8x32xf32>
    %cst_14 = arith.constant dense<0.000000e+00> : vector<8x32xf32>
    %33 = vector.multi_reduction <add>, %32, %cst_14 [1] : vector<8x8x32xf32> to vector<8x32xf32>
    %c0_15 = arith.constant 0 : index
    %c0_16 = arith.constant 0 : index
    %34 = vector.load %arg5[%c0_15, %c0_16] : memref<8x32xf32, #tpu.memory_space<vmem>>, vector<8x32xf32>
    tpu.vector_store %arg5[%c0_15, %c0_16], %33 {strides = array<i32>} : memref<8x32xf32, #tpu.memory_space<vmem>>, vector<8x32xf32>,
    return
  }
  func.func @transform_0(%arg0: i32) -> (i32, i32, i32) {
    %c0_i32 = arith.constant 0 : i32
    %c0_i32_0 = arith.constant 0 : i32
    %c0_i32_1 = arith.constant 0 : i32
    return %arg0, %c0_i32, %c0_i32_0 : i32, i32, i32
  }
  func.func @transform_1(%arg0: i32) -> (i32, i32) {
    %c0_i32 = arith.constant 0 : i32
    %c0_i32_0 = arith.constant 0 : i32
    return %arg0, %c0_i32 : i32, i32
  }
  func.func @transform_2(%arg0: i32) -> (i32, i32) {
    %c0_i32 = arith.constant 0 : i32
    %c0_i32_0 = arith.constant 0 : i32
    %c0_i32_1 = arith.constant 0 : i32
    return %c0_i32, %c0_i32_0 : i32, i32
  }
  func.func @transform_3(%arg0: i32) -> (i32, i32) {
    %c0_i32 = arith.constant 0 : i32
    %c0_i32_0 = arith.constant 0 : i32
    %c0_i32_1 = arith.constant 0 : i32
    return %c0_i32, %c0_i32_0 : i32, i32
  }
  func.func @transform_4(%arg0: i32) -> (i32, i32) {
    %c0_i32 = arith.constant 0 : i32
    %c0_i32_0 = arith.constant 0 : i32
    return %arg0, %c0_i32 : i32, i32
  }
  func.func @transform_5(%arg0: i32) -> (i32, i32) {
    %c0_i32 = arith.constant 0 : i32
    %c0_i32_0 = arith.constant 0 : i32
    return %arg0, %c0_i32 : i32, i32
  }
}

</mosaic_0001>

<llo_original>
// kernel: tpu_custom_call.1
$region0: #{tpu_custom_call.1}
  #allocation0 [shape = 'u32[]', space=smem, size = 0x4, offset = 0x4, fixed_abs, tag = 'smem constant byte address 0x4 - core index']
  #allocation1 [shape = 'u32[144,128]{1,0:T(1,128)}', space=vmem, size = 0x12000, scoped, tag = 'internal scratch']
  %s0 = inlined_call_operand.hbm [shape: f32[16,8,32], index: 0, kind: input, shape index: {}]
  %s1 = inlined_call_operand.hbm [shape: f32[16,32], index: 1, kind: input, shape index: {}]
  %s2 = inlined_call_operand.hbm [shape: f32[32,32], index: 2, kind: input, shape index: {}]
  %s3 = inlined_call_operand.vmem [shape: f32[1,32], index: 3, kind: input, shape index: {}]
  %s4 = inlined_call_operand.hbm [shape: f32[16,32], index: 4, kind: output, shape index: {0}]
  %s5 = inlined_call_operand.vmem [shape: f32[16,8], index: 5, kind: output, shape index: {1}]
  %6 = xla_tuple %s4, %s5
  %s7 = sld [smem:[#allocation0]]
  $region69: #{tpu_custom_call.1} parent=0
    _
  %s9 = ssub.s32 1, %s7
  %s10 = scalar_select 0, %s9, %s7
  $region1: #{tpu_custom_call.1} parent=0
    #allocation2 [shape = 'u8[65536]{0}', space=vmem, size = 0x10000, scoped, tag = 'input window, operand 0']
    #allocation3 [shape = 's32[2]{0}', space=sflag, size = 0x8, scoped, tag = 'scoped memory for tpu_custom_call.1']
    #allocation4 [shape = 's32[2]{0}', space=sflag, size = 0x8, scoped, tag = 'scoped memory for tpu_custom_call.1']
    #allocation5 [shape = 'u8[8192]{0}', space=vmem, size = 0x2000, scoped, tag = 'input window, operand 1']
    #allocation6 [shape = 's32[2]{0}', space=sflag, size = 0x8, scoped, tag = 'scoped memory for tpu_custom_call.1']
    #allocation7 [shape = 'u8[16384]{0}', space=vmem, size = 0x4000, scoped, tag = 'input window, operand 2, single buffered']
    #allocation8 [shape = 'u8[8192]{0}', space=vmem, size = 0x2000, scoped, tag = 'output window, operand 0']
    %11 = vsyncpa [#allocation3], 0
    %s12 = scalar_lea.sflag [#allocation3], 1
    %13 = vsyncpa %s12, 0
    %14 = vsyncpa [#allocation6], 0
    %s15 = scalar_lea.sflag [#allocation6], 1
    %16 = vsyncpa %s15, 0
    %17 = vsyncpa [#allocation4], 0
    %s18 = scalar_lea.sflag [#allocation4], 1
    %19 = vsyncpa %s18, 0
    loop: start=0, step=1, limit=4
    $region2: #{tpu_custom_call.1} parent=1 // loop_pre_header
      _
    $region3: #{tpu_custom_call.1} parent=1 // loop_header
      %s21 = sphi 0, %s25
      %p22 = scmp.ge.s32.totalorder %s21, 4
      %s31 = sphi 0, %s33
      %s34 = sphi 0, %s31
      %s35 = sphi 0, %s34
      %s51 = sphi 0, %s35
      %s57 = sphi 0, %s59
      %s60 = sphi 0, %s57
      %s61 = sphi 0, %s60
      %s77 = sphi 0, %s61
      %s81 = sphi 0, %s81
      %s83 = sphi 0, %s81
      %s84 = sphi 0, %s83
      %s98 = sphi 0, %s84
      %s102 = sphi 0, %s102
      %s104 = sphi 0, %s102
      %s105 = sphi 0, %s104
      %s119 = sphi 0, %s105
      %s125 = sphi 0, %s127
      %s128 = sphi 0, %s125
      %s129 = sphi 0, %s128
      %s145 = sphi 0, %s129
      %s151 = sphi 0, %s153
      %s154 = sphi 0, %s151
      %s155 = sphi 0, %s154
      %s171 = sphi 0, %s155
    $region4: #{tpu_custom_call.1} parent=1 // loop_header_branch
      %24 = sbr.rel (%p22) target = $region8
    $region5: #{tpu_custom_call.1} parent=1 // loop_body
      %s26 = ssub.s32 %s21, 1
      %s27 = ssub.s32 %s21, 2
      %s28 = sadd.s32 %s21, 1
      %s29 = ssub.s32 %s21, %s28
      %p30 = scmp.eq.s32.totalorder %s29, 0
      %s32 = sadd.s32 %s31, 1
      %s33 = scalar_select %p30, %s31, %s32
      %p36 = pneg %p30
      %p37 = scmp.eq.s32.totalorder %s21, 1
      %p38 = por %p36, %p37
      %p39 = scmp.ne.s32.totalorder %s31, %s34
      %p40 = scmp.eq.s32.totalorder %s21, 0
      %p41 = por %p39, %p40
      %p42 = scmp.ne.s32.totalorder %s31, %s34
      %p43 = scmp.eq.s32.totalorder %s26, 1
      %p44 = por %p42, %p43
      %p45 = scmp.ne.s32.totalorder %s34, %s35
      %p46 = scmp.eq.s32.totalorder %s26, 0
      %p47 = por %p45, %p46
      %p48 = scmp.ne.s32.totalorder %s34, %s35
      %p49 = scmp.eq.s32.totalorder %s27, 1
      %p50 = por %p48, %p49
      %p52 = scmp.ne.s32.totalorder %s35, %s51
      %p53 = scmp.eq.s32.totalorder %s27, 0
      %p54 = por %p52, %p53
      %s55 = ssub.s32 %s21, %s28
      %p56 = scmp.eq.s32.totalorder %s55, 0
      %s58 = sadd.s32 %s57, 1
      %s59 = scalar_select %p56, %s57, %s58
      %p62 = pneg %p56
      %p63 = scmp.eq.s32.totalorder %s21, 1
      %p64 = por %p62, %p63
      %p65 = scmp.ne.s32.totalorder %s57, %s60
      %p66 = scmp.eq.s32.totalorder %s21, 0
      %p67 = por %p65, %p66
      %p68 = scmp.ne.s32.totalorder %s57, %s60
      %p69 = scmp.eq.s32.totalorder %s26, 1
      %p70 = por %p68, %p69
      %p71 = scmp.ne.s32.totalorder %s60, %s61
      %p72 = scmp.eq.s32.totalorder %s26, 0
      %p73 = por %p71, %p72
      %p74 = scmp.ne.s32.totalorder %s60, %s61
      %p75 = scmp.eq.s32.totalorder %s27, 1
      %p76 = por %p74, %p75
      %p78 = scmp.ne.s32.totalorder %s61, %s77
      %p79 = scmp.eq.s32.totalorder %s27, 0
      %p80 = por %p78, %p79
      %s82 = sadd.s32 %s81, 1
      %p85 = scmp.eq.s32.totalorder %s21, 1
      %p86 = scmp.ne.s32.totalorder %s81, %s83
      %p87 = scmp.eq.s32.totalorder %s21, 0
      %p88 = por %p86, %p87
      %p89 = scmp.ne.s32.totalorder %s81, %s83
      %p90 = scmp.eq.s32.totalorder %s26, 1
      %p91 = por %p89, %p90
      %p92 = scmp.ne.s32.totalorder %s83, %s84
      %p93 = scmp.eq.s32.totalorder %s26, 0
      %p94 = por %p92, %p93
      %p95 = scmp.ne.s32.totalorder %s83, %s84
      %p96 = scmp.eq.s32.totalorder %s27, 1
      %p97 = por %p95, %p96
      %p99 = scmp.ne.s32.totalorder %s84, %s98
      %p100 = scmp.eq.s32.totalorder %s27, 0
      %p101 = por %p99, %p100
      %s103 = sadd.s32 %s102, 1
      %p106 = scmp.eq.s32.totalorder %s21, 1
      %p107 = scmp.ne.s32.totalorder %s102, %s104
      %p108 = scmp.eq.s32.totalorder %s21, 0
      %p109 = por %p107, %p108
      %p110 = scmp.ne.s32.totalorder %s102, %s104
      %p111 = scmp.eq.s32.totalorder %s26, 1
      %p112 = por %p110, %p111
      %p113 = scmp.ne.s32.totalorder %s104, %s105
      %p114 = scmp.eq.s32.totalorder %s26, 0
      %p115 = por %p113, %p114
      %p116 = scmp.ne.s32.totalorder %s104, %s105
      %p117 = scmp.eq.s32.totalorder %s27, 1
      %p118 = por %p116, %p117
      %p120 = scmp.ne.s32.totalorder %s105, %s119
      %p121 = scmp.eq.s32.totalorder %s27, 0
      %p122 = por %p120, %p121
      %s123 = ssub.s32 %s21, %s28
      %p124 = scmp.eq.s32.totalorder %s123, 0
      %s126 = sadd.s32 %s125, 1
      %s127 = scalar_select %p124, %s125, %s126
      %p130 = pneg %p124
      %p131 = scmp.eq.s32.totalorder %s21, 1
      %p132 = por %p130, %p131
      %p133 = scmp.ne.s32.totalorder %s125, %s128
      %p134 = scmp.eq.s32.totalorder %s21, 0
      %p135 = por %p133, %p134
      %p136 = scmp.ne.s32.totalorder %s125, %s128
      %p137 = scmp.eq.s32.totalorder %s26, 1
      %p138 = por %p136, %p137
      %p139 = scmp.ne.s32.totalorder %s128, %s129
      %p140 = scmp.eq.s32.totalorder %s26, 0
      %p141 = por %p139, %p140
      %p142 = scmp.ne.s32.totalorder %s128, %s129
      %p143 = scmp.eq.s32.totalorder %s27, 1
      %p144 = por %p142, %p143
      %p146 = scmp.ne.s32.totalorder %s129, %s145
      %p147 = scmp.eq.s32.totalorder %s27, 0
      %p148 = por %p146, %p147
      %s149 = ssub.s32 %s21, %s28
      %p150 = scmp.eq.s32.totalorder %s149, 0
      %s152 = sadd.s32 %s151, 1
      %s153 = scalar_select %p150, %s151, %s152
      %p156 = pneg %p150
      %p157 = scmp.eq.s32.totalorder %s21, 1
      %p158 = por %p156, %p157
      %p159 = scmp.ne.s32.totalorder %s151, %s154
      %p160 = scmp.eq.s32.totalorder %s21, 0
      %p161 = por %p159, %p160
      %p162 = scmp.ne.s32.totalorder %s151, %s154
      %p163 = scmp.eq.s32.totalorder %s26, 1
      %p164 = por %p162, %p163
      %p165 = scmp.ne.s32.totalorder %s154, %s155
      %p166 = scmp.eq.s32.totalorder %s26, 0
      %p167 = por %p165, %p166
      %p168 = scmp.ne.s32.totalorder %s154, %s155
      %p169 = scmp.eq.s32.totalorder %s27, 1
      %p170 = por %p168, %p169
      %p172 = scmp.ne.s32.totalorder %s155, %s171
      %p173 = scmp.eq.s32.totalorder %s27, 0
      %p174 = por %p172, %p173
      %p175 = scmp.le.s32.totalorder 1, %s21
      %p176 = scmp.lt.s32.totalorder %s21, 3
      %p177 = pnand %p175, %p176
      %p178 = pneg %p177
      // Predicated region
      $region9: #{tpu_custom_call.1} parent=5 // pred_check
        _
      $region10: #{tpu_custom_call.1} parent=5 // pred_check_branch
        %180 = sbr.rel (%p177) target = $region12
      $region11: #{tpu_custom_call.1} parent=5 // pred_region
        %s181 = ssub.s32 %s21, 1
        // Predicated region
        $region13: #{tpu_custom_call.1} parent=11 // pred_check
          %p182 = pneg %p94
        $region14: #{tpu_custom_call.1} parent=11 // pred_check_branch
          %184 = sbr.rel (%p182) target = $region16
        $region15: #{tpu_custom_call.1} parent=11 // pred_region
          %s186 = ssub.s32 512, 512
          %187 = vsyncadd [#allocation6], %s186
          %s188 = sshll.u32 [#allocation7], 4
          %s189 = int_to_ptr.vmem [resolvable:$true] %s188
          %194 = dma.hbm_to_vmem [thread:$0]  %s2, 512, %s189, [#allocation6], 128, 128, 8
        $region16: #{tpu_custom_call.1} parent=11 // pred_fallthru
          _
        // Predicated region
        $region17: #{tpu_custom_call.1} parent=11 // pred_check
          %p195 = pneg %p115
        $region18: #{tpu_custom_call.1} parent=11 // pred_check_branch
          %197 = sbr.rel (%p195) target = $region20
        $region19: #{tpu_custom_call.1} parent=11 // pred_region
          _
        $region20: #{tpu_custom_call.1} parent=11 // pred_fallthru
          _
      $region12: #{tpu_custom_call.1} parent=5 // pred_fallthru
        _
      %p198 = scmp.lt.s32.totalorder %s21, 2
      // Predicated region
      $region21: #{tpu_custom_call.1} parent=5 // pred_check
        %p199 = pneg %p198
      $region22: #{tpu_custom_call.1} parent=5 // pred_check_branch
        %201 = sbr.rel (%p199) target = $region24
      $region23: #{tpu_custom_call.1} parent=5 // pred_region
        // Predicated region
        $region25: #{tpu_custom_call.1} parent=23 // pred_check
          %p202 = pneg %p41
        $region26: #{tpu_custom_call.1} parent=23 // pred_check_branch
          %204 = sbr.rel (%p202) target = $region28
        $region27: #{tpu_custom_call.1} parent=23 // pred_region
          %s205 = sand.u32 %s31, 1
          %s206 = scalar_lea.sflag [#allocation3], %s205
          %s207 = sand.u32 %s31, 1
          %s208 = smul.addr %s207, 64
          %s209 = scalar_lea.vmem [#allocation2], %s208
          %s210 = smul.u32 8, %s21
          %s212 = ssub.s32 1024, 1024
          %213 = vsyncadd %s206, %s212
          %s214 = smul.addr %s210, 128
          %s215 = scalar_lea.hbm %s0, %s214
          %s216 = sshll.u32 %s209, 4
          %s217 = int_to_ptr.vmem [resolvable:$true] %s216
          %222 = dma.hbm_to_vmem [thread:$0]  %s215, 1024, %s217, %s206, 128, 128, 8
        $region28: #{tpu_custom_call.1} parent=23 // pred_fallthru
          _
        // Predicated region
        $region29: #{tpu_custom_call.1} parent=23 // pred_check
          %p223 = pneg %p67
        $region30: #{tpu_custom_call.1} parent=23 // pred_check_branch
          %225 = sbr.rel (%p223) target = $region32
        $region31: #{tpu_custom_call.1} parent=23 // pred_region
          %s226 = sand.u32 %s21, 1
          %s227 = scalar_lea.sflag [#allocation6], %s226
          %s228 = sand.u32 %s57, 1
          %s229 = smul.addr %s228, 8
          %s230 = scalar_lea.vmem [#allocation5], %s229
          %s232 = ssub.s32 128, 128
          %233 = vsyncadd %s227, %s232
          %s234 = smul.addr %s21, 128
          %s235 = scalar_lea.hbm %s1, %s234
          %s237 = sshll.u32 %s230, 4
          %s238 = int_to_ptr.vmem [resolvable:$true] %s237
          %240 = dma.hbm_to_vmem [thread:$0]  %s235, 128, %s238, %s227
        $region32: #{tpu_custom_call.1} parent=23 // pred_fallthru
          _
      $region24: #{tpu_custom_call.1} parent=5 // pred_fallthru
        _
      %p241 = scmp.le.s32.totalorder 1, %s21
      %p242 = scmp.lt.s32.totalorder %s21, 3
      %p243 = pnand %p241, %p242
      %p244 = pneg %p243
      // Predicated region
      $region33: #{tpu_custom_call.1} parent=5 // pred_check
        _
      $region34: #{tpu_custom_call.1} parent=5 // pred_check_branch
        %246 = sbr.rel (%p243) target = $region36
      $region35: #{tpu_custom_call.1} parent=5 // pred_region
        %s247 = ssub.s32 %s21, 1
        %s248 = sand.u32 %s34, 1
        %s249 = scalar_lea.sflag [#allocation3], %s248
        %s250 = sand.u32 %s34, 1
        %s251 = smul.addr %s250, 64
        %s252 = scalar_lea.vmem [#allocation2], %s251
        // Predicated region
        $region37: #{tpu_custom_call.1} parent=35 // pred_check
          %p253 = pneg %p47
        $region38: #{tpu_custom_call.1} parent=35 // pred_check_branch
          %255 = sbr.rel (%p253) target = $region40
        $region39: #{tpu_custom_call.1} parent=35 // pred_region
          %256 = dma.done %s249, 1024
        $region40: #{tpu_custom_call.1} parent=35 // pred_fallthru
          _
        %s257 = sand.u32 %s26, 1
        %s258 = scalar_lea.sflag [#allocation6], %s257
        %s259 = sand.u32 %s60, 1
        %s260 = smul.addr %s259, 8
        %s261 = scalar_lea.vmem [#allocation5], %s260
        // Predicated region
        $region41: #{tpu_custom_call.1} parent=35 // pred_check
          %p262 = pneg %p73
        $region42: #{tpu_custom_call.1} parent=35 // pred_check_branch
          %264 = sbr.rel (%p262) target = $region44
        $region43: #{tpu_custom_call.1} parent=35 // pred_region
          %265 = dma.done %s258, 128
        $region44: #{tpu_custom_call.1} parent=35 // pred_fallthru
          _
        // Predicated region
        $region45: #{tpu_custom_call.1} parent=35 // pred_check
          %p266 = pneg %p94
        $region46: #{tpu_custom_call.1} parent=35 // pred_check_branch
          %268 = sbr.rel (%p266) target = $region48
        $region47: #{tpu_custom_call.1} parent=35 // pred_region
          %269 = dma.done [#allocation6], 512
        $region48: #{tpu_custom_call.1} parent=35 // pred_fallthru
          _
        %s270 = sand.u32 %s34, 1
        %s271 = scalar_lea.sflag [#allocation3], %s270
        %s272 = sand.u32 %s34, 1
        %s273 = smul.addr %s272, 64
        %s274 = scalar_lea.vmem [#allocation2], %s273
        %p275 = pneg %p47
        %p276 = pneg %p44
        %s277 = sand.u32 %s26, 1
        %s278 = scalar_lea.sflag [#allocation6], %s277
        %s279 = sand.u32 %s60, 1
        %s280 = smul.addr %s279, 8
        %s281 = scalar_lea.vmem [#allocation5], %s280
        %p282 = pneg %p73
        %p283 = pneg %p70
        %p284 = pneg %p94
        %p285 = pneg %p91
        %p286 = pneg %p115
        %p287 = pneg %p112
        %p288 = pneg %p141
        %p289 = pneg %p138
        %s290 = sand.u32 %s128, 1
        %s291 = scalar_lea.sflag [#allocation4], %s290
        %s292 = sand.u32 %s128, 1
        %s293 = smul.addr %s292, 8
        %s294 = scalar_lea.vmem [#allocation8], %s293
        %p295 = pneg %p167
        %p296 = pneg %p164
        %p297 = scmp.lt.s32.totalorder %s26, 1
        %s298 = scalar_select %p297, %s26, 1
        %s299 = smul.addr %s298, 8
        %s300 = scalar_lea.vmem %s5, %s299
        %s301 = smul.u32 8, %s26
        %p302 = scmp.lt.s32.totalorder %s26, 1
        %s303 = scalar_select %p302, %s26, 1
        %s304 = smul.addr %s303, 8
        %s305 = scalar_lea.vmem %s5, %s304
        %v306 = vld [vmem:[%s252] sm:$0xff]
        %v307 = vld [vmem:[%s252 + $0x8] sm:$0xff]
        %v308 = vld [vmem:[%s252 + $0x10] sm:$0xff]
        %v309 = vld [vmem:[%s252 + $0x18] sm:$0xff]
        %v310 = vld [vmem:[%s252 + $0x20] sm:$0xff]
        %v311 = vld [vmem:[%s252 + $0x28] sm:$0xff]
        %v312 = vld [vmem:[%s252 + $0x30] sm:$0xff]
        %v313 = vld [vmem:[%s252 + $0x38] sm:$0xff]
        %v314 = vld [vmem:[#allocation7] sm:$0xff]
        %v315 = vld [vmem:[#allocation7 + $0x8] sm:$0xff]
        %v316 = vld [vmem:[#allocation7 + $0x10] sm:$0xff]
        %v317 = vld [vmem:[#allocation7 + $0x18] sm:$0xff]
        %vm318 = vcmask 261120
        %v320 = vsel %vm318, %v306, 0
        %v323 = vsel %vm318, %v307, 0
        %v326 = vsel %vm318, %v308, 0
        %v329 = vsel %vm318, %v309, 0
        %v332 = vsel %vm318, %v310, 0
        %v335 = vsel %vm318, %v311, 0
        %v338 = vsel %vm318, %v312, 0
        %v341 = vsel %vm318, %v313, 0
        %343 = vmatprep.subr.mxu0 0.0
        %344 = vmatpush1.msra.mxu0 %v314
        %345 = vmatprep.subr.mxu0 0.0
        %346 = vmatpush1.msra.mxu0 %v315
        %347 = vmatprep.subr.mxu0 0.0
        %348 = vmatpush1.msra.mxu0 %v316
        %349 = vmatprep.subr.mxu0 0.0
        %350 = vmatpush1.msra.mxu0 %v317
        %351 = vmatprep.subr.mxu0 0.0
        %352 = vmatpush1.msra.mxu0 0.0
        %353 = vmatprep.subr.mxu0 0.0
        %354 = vmatpush1.msra.mxu0 0.0
        %355 = vmatprep.subr.mxu0 0.0
        %356 = vmatpush1.msra.mxu0 0.0
        %357 = vmatprep.subr.mxu0 0.0
        %358 = vmatpush1.msra.mxu0 0.0
        %359 = vmatprep.subr.mxu0 0.0
        %360 = vmatpush1.msra.mxu0 0.0
        %361 = vmatprep.subr.mxu0 0.0
        %362 = vmatpush1.msra.mxu0 0.0
        %363 = vmatprep.subr.mxu0 0.0
        %364 = vmatpush1.msra.mxu0 0.0
        %365 = vmatprep.subr.mxu0 0.0
        %366 = vmatpush1.msra.mxu0 0.0
        %367 = vmatprep.subr.mxu0 0.0
        %368 = vmatpush1.msra.mxu0 0.0
        %369 = vmatprep.subr.mxu0 0.0
        %370 = vmatpush1.msra.mxu0 0.0
        %371 = vmatprep.subr.mxu0 0.0
        %372 = vmatpush1.msra.mxu0 0.0
        %373 = vmatprep.subr.mxu0 0.0
        %374 = vmatpush1.msra.mxu0 0.0
        %375 = vmatprep.subr.mxu0 0.0
        %376 = vmatpush1.msra.mxu0 0.0
        %377 = vmatprep.subr.mxu0 0.0
        %378 = vmatpush1.msra.mxu0 0.0
        %379 = vmatprep.subr.mxu0 0.0
        %380 = vmatpush1.msra.mxu0 0.0
        %381 = vmatprep.subr.mxu0 0.0
        %382 = vmatpush1.msra.mxu0 0.0
        %383 = vmatprep.subr.mxu0 0.0
        %384 = vmatpush1.msra.mxu0 0.0
        %385 = vmatprep.subr.mxu0 0.0
        %386 = vmatpush1.msra.mxu0 0.0
        %387 = vmatprep.subr.mxu0 0.0
        %388 = vmatpush1.msra.mxu0 0.0
        %389 = vmatprep.subr.mxu0 0.0
        %390 = vmatpush1.msra.mxu0 0.0
        %391 = vmatprep.subr.mxu0 0.0
        %392 = vmatpush1.msra.mxu0 0.0
        %393 = vmatprep.subr.mxu0 0.0
        %394 = vmatpush1.msra.mxu0 0.0
        %395 = vmatprep.subr.mxu0 0.0
        %396 = vmatpush1.msra.mxu0 0.0
        %397 = vmatprep.subr.mxu0 0.0
        %398 = vmatpush1.msra.mxu0 0.0
        %399 = vmatprep.subr.mxu0 0.0
        %400 = vmatpush1.msra.mxu0 0.0
        %401 = vmatprep.subr.mxu0 0.0
        %402 = vmatpush1.msra.mxu0 0.0
        %403 = vmatprep.subr.mxu0 0.0
        %404 = vmatpush1.msra.mxu0 0.0
        %405 = vmatprep.subr.mxu0 0.0
        %406 = vmatpush1.msra.mxu0 0.0
        %407 = vmatprep.mubr.f32.mxu0 0.0
        %408 = vmatmul.mubr.f32.gmra.mrb[0].mxu0 %v320
        %v409 = vpop.f32.mrb[0].mxu0
        %v410 = vadd.f32 0.0, %v409
        %v411 = vpop.f32.mrb[0].mxu0
        %412 = vmatprep.mubr.f32.mxu0 0.0
        %413 = vmatmul.mubr.f32.gmra.mrb[0].mxu0 %v323
        %v414 = vpop.f32.mrb[0].mxu0
        %v415 = vadd.f32 0.0, %v414
        %v416 = vpop.f32.mrb[0].mxu0
        %417 = vmatprep.mubr.f32.mxu0 0.0
        %418 = vmatmul.mubr.f32.gmra.mrb[0].mxu0 %v326
        %v419 = vpop.f32.mrb[0].mxu0
        %v420 = vadd.f32 0.0, %v419
        %v421 = vpop.f32.mrb[0].mxu0
        %422 = vmatprep.mubr.f32.mxu0 0.0
        %423 = vmatmul.mubr.f32.gmra.mrb[0].mxu0 %v329
        %v424 = vpop.f32.mrb[0].mxu0
        %v425 = vadd.f32 0.0, %v424
        %v426 = vpop.f32.mrb[0].mxu0
        %427 = vmatprep.mubr.f32.mxu0 0.0
        %428 = vmatmul.mubr.f32.gmra.mrb[0].mxu0 %v332
        %v429 = vpop.f32.mrb[0].mxu0
        %v430 = vadd.f32 0.0, %v429
        %v431 = vpop.f32.mrb[0].mxu0
        %432 = vmatprep.mubr.f32.mxu0 0.0
        %433 = vmatmul.mubr.f32.gmra.mrb[0].mxu0 %v335
        %v434 = vpop.f32.mrb[0].mxu0
        %v435 = vadd.f32 0.0, %v434
        %v436 = vpop.f32.mrb[0].mxu0
        %437 = vmatprep.mubr.f32.mxu0 0.0
        %438 = vmatmul.mubr.f32.gmra.mrb[0].mxu0 %v338
        %v439 = vpop.f32.mrb[0].mxu0
        %v440 = vadd.f32 0.0, %v439
        %v441 = vpop.f32.mrb[0].mxu0
        %442 = vmatprep.mubr.f32.mxu0 0.0
        %443 = vmatmul.mubr.f32.gmra.mrb[0].mxu0 %v341
        %v444 = vpop.f32.mrb[0].mxu0
        %v445 = vadd.f32 0.0, %v444
        %v446 = vpop.f32.mrb[0].mxu0
        %447 = vdwg.mxu0
        %v448 = vld [vmem:[%s261] sm:$0xff]
        %v450 = vcombine.high %v448, %v448
        %v452 = vunpack.c.l.s4 1966171168
        %v453 = vunpack.c.0.s8 %v452
        %v454 = vlaneseq
        %v455 = vshrl.u32 %v454, 7
        %v456 = vsub.s32 %v453, %v455
        %v457 = vrot.slane %v448, %v456
        %v459 = vunpack.c.l.s4 1966171168
        %v460 = vunpack.c.0.s8 %v459
        %v461 = vlaneseq
        %v462 = vshrl.u32 %v461, 7
        %v463 = vsub.s32 %v460, %v462
        %v464 = vrot.slane %v450, %v463
        %v465 = vcombine.high %v457, %v457
        %v466 = vcombine.high %v464, %v464
        %v468 = vunpack.c.l.s4 1966171168
        %v469 = vunpack.c.0.s8 %v468
        %v470 = vlaneseq
        %v471 = vshrl.u32 %v470, 7
        %v472 = vsub.s32 %v469, %v471
        %v473 = vrot.slane %v457, %v472
        %v475 = vunpack.c.l.s4 1966171168
        %v476 = vunpack.c.0.s8 %v475
        %v477 = vlaneseq
        %v478 = vshrl.u32 %v477, 7
        %v479 = vsub.s32 %v476, %v478
        %v480 = vrot.slane %v464, %v479
        %v482 = vunpack.c.l.s4 1966171168
        %v483 = vunpack.c.0.s8 %v482
        %v484 = vlaneseq
        %v485 = vshrl.u32 %v484, 7
        %v486 = vsub.s32 %v483, %v485
        %v487 = vrot.slane %v465, %v486
        %v489 = vunpack.c.l.s4 1966171168
        %v490 = vunpack.c.0.s8 %v489
        %v491 = vlaneseq
        %v492 = vshrl.u32 %v491, 7
        %v493 = vsub.s32 %v490, %v492
        %v494 = vrot.slane %v466, %v493
        %v495 = vcombine.high %v473, %v473
        %v496 = vcombine.high %v480, %v480
        %v497 = vcombine.high %v487, %v487
        %v498 = vcombine.high %v494, %v494
        %v499 = vlaneseq
        %v500 = vshrl.u32 %v499, 7
        %v501 = vsub.s32 0, %v500
        %v502 = vrot.slane %v473, %v501
        %v503 = vlaneseq
        %v504 = vshrl.u32 %v503, 7
        %v505 = vsub.s32 0, %v504
        %v506 = vrot.slane %v487, %v505
        %v507 = vlaneseq
        %v508 = vshrl.u32 %v507, 7
        %v509 = vsub.s32 0, %v508
        %v510 = vrot.slane %v495, %v509
        %v511 = vlaneseq
        %v512 = vshrl.u32 %v511, 7
        %v513 = vsub.s32 0, %v512
        %v514 = vrot.slane %v497, %v513
        %v515 = vlaneseq
        %v516 = vshrl.u32 %v515, 7
        %v517 = vsub.s32 0, %v516
        %v518 = vrot.slane %v480, %v517
        %v519 = vlaneseq
        %v520 = vshrl.u32 %v519, 7
        %v521 = vsub.s32 0, %v520
        %v522 = vrot.slane %v494, %v521
        %v523 = vlaneseq
        %v524 = vshrl.u32 %v523, 7
        %v525 = vsub.s32 0, %v524
        %v526 = vrot.slane %v496, %v525
        %v527 = vlaneseq
        %v528 = vshrl.u32 %v527, 7
        %v529 = vsub.s32 0, %v528
        %v530 = vrot.slane %v498, %v529
        %v539 = vadd.f32 %v410, %v502
        %v540 = vadd.f32 %v415, %v506
        %v541 = vadd.f32 %v420, %v510
        %v542 = vadd.f32 %v425, %v514
        %v543 = vadd.f32 %v430, %v518
        %v544 = vadd.f32 %v435, %v522
        %v545 = vadd.f32 %v440, %v526
        %v546 = vadd.f32 %v445, %v530
        %v547 = vtanh.pop %v539
        %v548 = vtanh.pop %v540
        %v549 = vtanh.pop %v541
        %v550 = vtanh.pop %v542
        %v551 = vtanh.pop %v543
        %v552 = vtanh.pop %v544
        %v553 = vtanh.pop %v545
        %v554 = vtanh.pop %v546
        %v555 = vld [vmem:[%s3] sm:$0x1]
        %v557 = vlaneseq
        %v558 = vshrl.u32 %v557, 7
        %v559 = vsub.s32 0, %v558
        %v560 = vrot.slane %v555, %v559
        %v562 = vmul.f32 %v547, %v560
        %v563 = vmul.f32 %v548, %v560
        %v564 = vmul.f32 %v549, %v560
        %v565 = vmul.f32 %v550, %v560
        %v566 = vmul.f32 %v551, %v560
        %v567 = vmul.f32 %v552, %v560
        %v568 = vmul.f32 %v553, %v560
        %v569 = vmul.f32 %v554, %v560
        %v570 = vsel %vm318, %v562, 0.0
        %571 = vadd.xlane.f32.xlu0 %v570
        %v572 = vpop.xlane.xlu0 %571
        %v573 = vsel %vm318, %v563, 0.0
        %574 = vadd.xlane.f32.xlu0 %v573
        %v575 = vpop.xlane.xlu0 %574
        %v576 = vsel %vm318, %v564, 0.0
        %577 = vadd.xlane.f32.xlu0 %v576
        %v578 = vpop.xlane.xlu0 %577
        %v579 = vsel %vm318, %v565, 0.0
        %580 = vadd.xlane.f32.xlu0 %v579
        %v581 = vpop.xlane.xlu0 %580
        %v582 = vsel %vm318, %v566, 0.0
        %583 = vadd.xlane.f32.xlu0 %v582
        %v584 = vpop.xlane.xlu0 %583
        %v585 = vsel %vm318, %v567, 0.0
        %586 = vadd.xlane.f32.xlu0 %v585
        %v587 = vpop.xlane.xlu0 %586
        %v588 = vsel %vm318, %v568, 0.0
        %589 = vadd.xlane.f32.xlu0 %v588
        %v590 = vpop.xlane.xlu0 %589
        %v591 = vsel %vm318, %v569, 0.0
        %592 = vadd.xlane.f32.xlu0 %v591
        %v593 = vpop.xlane.xlu0 %592
        %v602 = vlaneseq
        %v603 = vand.u32 %v602, 127
        %v604 = vlaneseq
        %v605 = vshrl.u32 %v604, 7
        %v606 = vsub.s32 %v603, %v605
        %v607 = vrot.slane %v572, %v606
        %v608 = vlaneseq
        %v609 = vshrl.u32 %v608, 7
        %v610 = vsub.s32 %v603, %v609
        %v611 = vrot.slane %v575, %v610
        %v612 = vlaneseq
        %v613 = vshrl.u32 %v612, 7
        %v614 = vsub.s32 %v603, %v613
        %v615 = vrot.slane %v578, %v614
        %v616 = vlaneseq
        %v617 = vshrl.u32 %v616, 7
        %v618 = vsub.s32 %v603, %v617
        %v619 = vrot.slane %v581, %v618
        %v620 = vlaneseq
        %v621 = vshrl.u32 %v620, 7
        %v622 = vsub.s32 %v603, %v621
        %v623 = vrot.slane %v584, %v622
        %v624 = vlaneseq
        %v625 = vshrl.u32 %v624, 7
        %v626 = vsub.s32 %v603, %v625
        %v627 = vrot.slane %v587, %v626
        %v628 = vlaneseq
        %v629 = vshrl.u32 %v628, 7
        %v630 = vsub.s32 %v603, %v629
        %v631 = vrot.slane %v590, %v630
        %v632 = vlaneseq
        %v633 = vshrl.u32 %v632, 7
        %v634 = vsub.s32 %v603, %v633
        %v635 = vrot.slane %v593, %v634
        %vm636 = vcmask 1041409
        %v637 = vsel %vm636, %v611, %v607
        %vm638 = vcmask 1042434
        %v639 = vsel %vm638, %v615, %v637
        %vm640 = vcmask 1043459
        %v641 = vsel %vm640, %v619, %v639
        %vm642 = vcmask 1044484
        %v643 = vsel %vm642, %v623, %v641
        %vm644 = vcmask 1045509
        %v645 = vsel %vm644, %v627, %v643
        %vm646 = vcmask 1046534
        %v647 = vsel %vm646, %v631, %v645
        %vm648 = vcmask 1047559
        %v649 = vsel %vm648, %v635, %v647
        %vm651 = vcmask 64512
        %v652 = vsel %vm651, %v649, -inf
        %653 = vmax.xlane.f32.xlu0 %v652
        %v654 = vpop.xlane.xlu0 %653
        %v656 = vlaneseq
        %v657 = vshrl.u32 %v656, 7
        %v658 = vsub.s32 0, %v657
        %v659 = vrot.slane %v654, %v658
        %v660 = vlaneseq
        %v661 = vshrl.u32 %v660, 7
        %v662 = vsub.s32 1, %v661
        %v663 = vrot.slane %v654, %v662
        %v664 = vlaneseq
        %v665 = vshrl.u32 %v664, 7
        %v666 = vsub.s32 2, %v665
        %v667 = vrot.slane %v654, %v666
        %v668 = vlaneseq
        %v669 = vshrl.u32 %v668, 7
        %v670 = vsub.s32 3, %v669
        %v671 = vrot.slane %v654, %v670
        %v672 = vlaneseq
        %v673 = vshrl.u32 %v672, 7
        %v674 = vsub.s32 4, %v673
        %v675 = vrot.slane %v654, %v674
        %v676 = vlaneseq
        %v677 = vshrl.u32 %v676, 7
        %v678 = vsub.s32 5, %v677
        %v679 = vrot.slane %v654, %v678
        %v680 = vlaneseq
        %v681 = vshrl.u32 %v680, 7
        %v682 = vsub.s32 6, %v681
        %v683 = vrot.slane %v654, %v682
        %v684 = vlaneseq
        %v685 = vshrl.u32 %v684, 7
        %v686 = vsub.s32 7, %v685
        %v687 = vrot.slane %v654, %v686
        %v696 = vsub.f32 %v572, %v659
        %v697 = vsub.f32 %v575, %v663
        %v698 = vsub.f32 %v578, %v667
        %v699 = vsub.f32 %v581, %v671
        %v700 = vsub.f32 %v584, %v675
        %v701 = vsub.f32 %v587, %v679
        %v702 = vsub.f32 %v590, %v683
        %v703 = vsub.f32 %v593, %v687
        %v704 = vmul.f32 %v696, 1.442695
        %v705 = vpow.pop %v704
        %v706 = vmul.f32 %v697, 1.442695
        %v707 = vpow.pop %v706
        %v708 = vmul.f32 %v698, 1.442695
        %v709 = vpow.pop %v708
        %v710 = vmul.f32 %v699, 1.442695
        %v711 = vpow.pop %v710
        %v712 = vmul.f32 %v700, 1.442695
        %v713 = vpow.pop %v712
        %v714 = vmul.f32 %v701, 1.442695
        %v715 = vpow.pop %v714
        %v716 = vmul.f32 %v702, 1.442695
        %v717 = vpow.pop %v716
        %v718 = vmul.f32 %v703, 1.442695
        %v719 = vpow.pop %v718
        %728 = vset.pattern.permute.xlu0 0
        %729 = vperm.xlu0 %728, %v705
        %v730 = vpop.permute.xlu0 %729
        %731 = vset.pattern.permute.xlu0 0
        %732 = vperm.xlu0 %731, %v707
        %v733 = vpop.permute.xlu0 %732
        %734 = vset.pattern.permute.xlu0 0
        %735 = vperm.xlu0 %734, %v709
        %v736 = vpop.permute.xlu0 %735
        %737 = vset.pattern.permute.xlu0 0
        %738 = vperm.xlu0 %737, %v711
        %v739 = vpop.permute.xlu0 %738
        %740 = vset.pattern.permute.xlu0 0
        %741 = vperm.xlu0 %740, %v713
        %v742 = vpop.permute.xlu0 %741
        %743 = vset.pattern.permute.xlu0 0
        %744 = vperm.xlu0 %743, %v715
        %v745 = vpop.permute.xlu0 %744
        %746 = vset.pattern.permute.xlu0 0
        %747 = vperm.xlu0 %746, %v717
        %v748 = vpop.permute.xlu0 %747
        %749 = vset.pattern.permute.xlu0 0
        %750 = vperm.xlu0 %749, %v719
        %v751 = vpop.permute.xlu0 %750
        %v752 = vlaneseq
        %v753 = vshrl.u32 %v752, 7
        %v754 = vsub.s32 %v603, %v753
        %v755 = vrot.slane %v730, %v754
        %v756 = vlaneseq
        %v757 = vshrl.u32 %v756, 7
        %v758 = vsub.s32 %v603, %v757
        %v759 = vrot.slane %v733, %v758
        %v760 = vlaneseq
        %v761 = vshrl.u32 %v760, 7
        %v762 = vsub.s32 %v603, %v761
        %v763 = vrot.slane %v736, %v762
        %v764 = vlaneseq
        %v765 = vshrl.u32 %v764, 7
        %v766 = vsub.s32 %v603, %v765
        %v767 = vrot.slane %v739, %v766
        %v768 = vlaneseq
        %v769 = vshrl.u32 %v768, 7
        %v770 = vsub.s32 %v603, %v769
        %v771 = vrot.slane %v742, %v770
        %v772 = vlaneseq
        %v773 = vshrl.u32 %v772, 7
        %v774 = vsub.s32 %v603, %v773
        %v775 = vrot.slane %v745, %v774
        %v776 = vlaneseq
        %v777 = vshrl.u32 %v776, 7
        %v778 = vsub.s32 %v603, %v777
        %v779 = vrot.slane %v748, %v778
        %v780 = vlaneseq
        %v781 = vshrl.u32 %v780, 7
        %v782 = vsub.s32 %v603, %v781
        %v783 = vrot.slane %v751, %v782
        %v784 = vsel %vm636, %v759, %v755
        %v785 = vsel %vm638, %v763, %v784
        %v786 = vsel %vm640, %v767, %v785
        %v787 = vsel %vm642, %v771, %v786
        %v788 = vsel %vm644, %v775, %v787
        %v789 = vsel %vm646, %v779, %v788
        %v790 = vsel %vm648, %v783, %v789
        %v792 = vsel %vm651, %v790, 0.0
        %793 = vadd.xlane.f32.xlu0 %v792
        %v794 = vpop.xlane.xlu0 %793
        %v795 = vrcp.pop %v794
        %v796 = vmul.f32 %v794, %v795
        %v797 = vsub.f32 2.0, %v796
        %v798 = vmul.f32 %v795, %v797
        %v800 = vlaneseq
        %v801 = vshrl.u32 %v800, 7
        %v802 = vsub.s32 0, %v801
        %v803 = vrot.slane %v798, %v802
        %v804 = vlaneseq
        %v805 = vshrl.u32 %v804, 7
        %v806 = vsub.s32 1, %v805
        %v807 = vrot.slane %v798, %v806
        %v808 = vlaneseq
        %v809 = vshrl.u32 %v808, 7
        %v810 = vsub.s32 2, %v809
        %v811 = vrot.slane %v798, %v810
        %v812 = vlaneseq
        %v813 = vshrl.u32 %v812, 7
        %v814 = vsub.s32 3, %v813
        %v815 = vrot.slane %v798, %v814
        %v816 = vlaneseq
        %v817 = vshrl.u32 %v816, 7
        %v818 = vsub.s32 4, %v817
        %v819 = vrot.slane %v798, %v818
        %v820 = vlaneseq
        %v821 = vshrl.u32 %v820, 7
        %v822 = vsub.s32 5, %v821
        %v823 = vrot.slane %v798, %v822
        %v824 = vlaneseq
        %v825 = vshrl.u32 %v824, 7
        %v826 = vsub.s32 6, %v825
        %v827 = vrot.slane %v798, %v826
        %v828 = vlaneseq
        %v829 = vshrl.u32 %v828, 7
        %v830 = vsub.s32 7, %v829
        %v831 = vrot.slane %v798, %v830
        %v840 = vmul.f32 %v705, %v803
        %v841 = vmul.f32 %v707, %v807
        %v842 = vmul.f32 %v709, %v811
        %v843 = vmul.f32 %v711, %v815
        %v844 = vmul.f32 %v713, %v819
        %v845 = vmul.f32 %v715, %v823
        %v846 = vmul.f32 %v717, %v827
        %v847 = vmul.f32 %v719, %v831
        %856 = vset.pattern.permute.xlu0 0
        %857 = vperm.xlu0 %856, %v840
        %v858 = vpop.permute.xlu0 %857
        %859 = vset.pattern.permute.xlu0 0
        %860 = vperm.xlu0 %859, %v841
        %v861 = vpop.permute.xlu0 %860
        %862 = vset.pattern.permute.xlu0 0
        %863 = vperm.xlu0 %862, %v842
        %v864 = vpop.permute.xlu0 %863
        %865 = vset.pattern.permute.xlu0 0
        %866 = vperm.xlu0 %865, %v843
        %v867 = vpop.permute.xlu0 %866
        %868 = vset.pattern.permute.xlu0 0
        %869 = vperm.xlu0 %868, %v844
        %v870 = vpop.permute.xlu0 %869
        %871 = vset.pattern.permute.xlu0 0
        %872 = vperm.xlu0 %871, %v845
        %v873 = vpop.permute.xlu0 %872
        %874 = vset.pattern.permute.xlu0 0
        %875 = vperm.xlu0 %874, %v846
        %v876 = vpop.permute.xlu0 %875
        %877 = vset.pattern.permute.xlu0 0
        %878 = vperm.xlu0 %877, %v847
        %v879 = vpop.permute.xlu0 %878
        %v880 = vlaneseq
        %v881 = vshrl.u32 %v880, 7
        %v882 = vsub.s32 %v603, %v881
        %v883 = vrot.slane %v858, %v882
        %v884 = vlaneseq
        %v885 = vshrl.u32 %v884, 7
        %v886 = vsub.s32 %v603, %v885
        %v887 = vrot.slane %v861, %v886
        %v888 = vlaneseq
        %v889 = vshrl.u32 %v888, 7
        %v890 = vsub.s32 %v603, %v889
        %v891 = vrot.slane %v864, %v890
        %v892 = vlaneseq
        %v893 = vshrl.u32 %v892, 7
        %v894 = vsub.s32 %v603, %v893
        %v895 = vrot.slane %v867, %v894
        %v896 = vlaneseq
        %v897 = vshrl.u32 %v896, 7
        %v898 = vsub.s32 %v603, %v897
        %v899 = vrot.slane %v870, %v898
        %v900 = vlaneseq
        %v901 = vshrl.u32 %v900, 7
        %v902 = vsub.s32 %v603, %v901
        %v903 = vrot.slane %v873, %v902
        %v904 = vlaneseq
        %v905 = vshrl.u32 %v904, 7
        %v906 = vsub.s32 %v603, %v905
        %v907 = vrot.slane %v876, %v906
        %v908 = vlaneseq
        %v909 = vshrl.u32 %v908, 7
        %v910 = vsub.s32 %v603, %v909
        %v911 = vrot.slane %v879, %v910
        %v912 = vsel %vm636, %v887, %v883
        %v913 = vsel %vm638, %v891, %v912
        %v914 = vsel %vm640, %v895, %v913
        %v915 = vsel %vm642, %v899, %v914
        %v916 = vsel %vm644, %v903, %v915
        %v917 = vsel %vm646, %v907, %v916
        %v918 = vsel %vm648, %v911, %v917
        %920 = vst.msk [vmem:[%s305] sm:$0xff] %vm651, %v918
        %v929 = vmul.f32 %v858, %v306
        %v930 = vmul.f32 %v861, %v307
        %v931 = vmul.f32 %v864, %v308
        %v932 = vmul.f32 %v867, %v309
        %v933 = vmul.f32 %v870, %v310
        %v934 = vmul.f32 %v873, %v311
        %v935 = vmul.f32 %v876, %v312
        %v936 = vmul.f32 %v879, %v313
        %v937 = vsel %vm318, %v929, 0.0
        %v938 = vrot.slane %v937, 4
        %v939 = vadd.f32 %v937, %v938
        %v940 = vrot.slane %v939, 2
        %v941 = vadd.f32 %v939, %v940
        %v942 = vrot.slane %v941, 1
        %v943 = vadd.f32 %v941, %v942
        %v944 = vsel %vm318, %v930, 0.0
        %v945 = vrot.slane %v944, 4
        %v946 = vadd.f32 %v944, %v945
        %v947 = vrot.slane %v946, 2
        %v948 = vadd.f32 %v946, %v947
        %v949 = vrot.slane %v948, 1
        %v950 = vadd.f32 %v948, %v949
        %v951 = vsel %vm318, %v931, 0.0
        %v952 = vrot.slane %v951, 4
        %v953 = vadd.f32 %v951, %v952
        %v954 = vrot.slane %v953, 2
        %v955 = vadd.f32 %v953, %v954
        %v956 = vrot.slane %v955, 1
        %v957 = vadd.f32 %v955, %v956
        %v958 = vsel %vm318, %v932, 0.0
        %v959 = vrot.slane %v958, 4
        %v960 = vadd.f32 %v958, %v959
        %v961 = vrot.slane %v960, 2
        %v962 = vadd.f32 %v960, %v961
        %v963 = vrot.slane %v962, 1
        %v964 = vadd.f32 %v962, %v963
        %v965 = vsel %vm318, %v933, 0.0
        %v966 = vrot.slane %v965, 4
        %v967 = vadd.f32 %v965, %v966
        %v968 = vrot.slane %v967, 2
        %v969 = vadd.f32 %v967, %v968
        %v970 = vrot.slane %v969, 1
        %v971 = vadd.f32 %v969, %v970
        %v972 = vsel %vm318, %v934, 0.0
        %v973 = vrot.slane %v972, 4
        %v974 = vadd.f32 %v972, %v973
        %v975 = vrot.slane %v974, 2
        %v976 = vadd.f32 %v974, %v975
        %v977 = vrot.slane %v976, 1
        %v978 = vadd.f32 %v976, %v977
        %v979 = vsel %vm318, %v935, 0.0
        %v980 = vrot.slane %v979, 4
        %v981 = vadd.f32 %v979, %v980
        %v982 = vrot.slane %v981, 2
        %v983 = vadd.f32 %v981, %v982
        %v984 = vrot.slane %v983, 1
        %v985 = vadd.f32 %v983, %v984
        %v986 = vsel %vm318, %v936, 0.0
        %v987 = vrot.slane %v986, 4
        %v988 = vadd.f32 %v986, %v987
        %v989 = vrot.slane %v988, 2
        %v990 = vadd.f32 %v988, %v989
        %v991 = vrot.slane %v990, 1
        %v992 = vadd.f32 %v990, %v991
        %v1001 = vsel %vm636, %v950, %v943
        %v1002 = vsel %vm638, %v957, %v1001
        %v1003 = vsel %vm640, %v964, %v1002
        %v1004 = vsel %vm642, %v971, %v1003
        %v1005 = vsel %vm644, %v978, %v1004
        %v1006 = vsel %vm646, %v985, %v1005
        %v1007 = vsel %vm648, %v992, %v1006
        %1009 = vst.msk [vmem:[%s294] sm:$0xff] %vm318, %v1007
        %s1010 = sand.u32 %s128, 1
        %s1011 = scalar_lea.sflag [#allocation4], %s1010
        %s1012 = sand.u32 %s128, 1
        %s1013 = smul.addr %s1012, 8
        %s1014 = scalar_lea.vmem [#allocation8], %s1013
        %p1015 = scmp.lt.s32.totalorder %s26, 1
        %s1016 = scalar_select %p1015, %s26, 1
        %s1017 = smul.addr %s1016, 8
        %s1018 = scalar_lea.vmem %s5, %s1017
        // Predicated region
        $region49: #{tpu_custom_call.1} parent=35 // pred_check
          %p1019 = pneg %p138
        $region50: #{tpu_custom_call.1} parent=35 // pred_check_branch
          %1021 = sbr.rel (%p1019) target = $region52
        $region51: #{tpu_custom_call.1} parent=35 // pred_region
          %s1023 = ssub.s32 128, 128
          %1024 = vsyncadd %s1011, %s1023
          %s1025 = smul.addr %s26, 128
          %s1026 = scalar_lea.hbm %s4, %s1025
          %s1028 = sshll.u32 %s1014, 4
          %s1029 = int_to_ptr.vmem [resolvable:$true] %s1028
          %1031 = dma.vmem_to_hbm [thread:$0]  %s1029, 128, %s1026, %s1011
        $region52: #{tpu_custom_call.1} parent=35 // pred_fallthru
          _
        // Predicated region
        $region53: #{tpu_custom_call.1} parent=35 // pred_check
          %p1032 = pneg %p164
        $region54: #{tpu_custom_call.1} parent=35 // pred_check_branch
          %1034 = sbr.rel (%p1032) target = $region56
        $region55: #{tpu_custom_call.1} parent=35 // pred_region
          _
        $region56: #{tpu_custom_call.1} parent=35 // pred_fallthru
          _
      $region36: #{tpu_custom_call.1} parent=5 // pred_fallthru
        _
      %p1035 = scmp.le.s32.totalorder 2, %s21
      // Predicated region
      $region57: #{tpu_custom_call.1} parent=5 // pred_check
        %p1036 = pneg %p1035
      $region58: #{tpu_custom_call.1} parent=5 // pred_check_branch
        %1038 = sbr.rel (%p1036) target = $region60
      $region59: #{tpu_custom_call.1} parent=5 // pred_region
        %s1039 = ssub.s32 %s21, 2
        // Predicated region
        $region61: #{tpu_custom_call.1} parent=59 // pred_check
          %p1040 = pneg %p144
        $region62: #{tpu_custom_call.1} parent=59 // pred_check_branch
          %1042 = sbr.rel (%p1040) target = $region64
        $region63: #{tpu_custom_call.1} parent=59 // pred_region
          %s1043 = sand.u32 %s129, 1
          %s1044 = scalar_lea.sflag [#allocation4], %s1043
          %s1045 = sand.u32 %s129, 1
          %s1046 = smul.addr %s1045, 8
          %s1047 = scalar_lea.vmem [#allocation8], %s1046
          %1048 = dma.done %s1044, 128
        $region64: #{tpu_custom_call.1} parent=59 // pred_fallthru
          _
        // Predicated region
        $region65: #{tpu_custom_call.1} parent=59 // pred_check
          %p1049 = pneg %p170
        $region66: #{tpu_custom_call.1} parent=59 // pred_check_branch
          %1051 = sbr.rel (%p1049) target = $region68
        $region67: #{tpu_custom_call.1} parent=59 // pred_region
          %p1052 = scmp.lt.s32.totalorder %s27, 1
          %s1053 = scalar_select %p1052, %s27, 1
          %s1054 = smul.addr %s1053, 8
          %s1055 = scalar_lea.vmem %s5, %s1054
        $region68: #{tpu_custom_call.1} parent=59 // pred_fallthru
          _
      $region60: #{tpu_custom_call.1} parent=5 // pred_fallthru
        _
    $region6: #{tpu_custom_call.1} parent=1 // loop_footer
      %s25 = sadd.s32 1, %s21
    $region7: #{tpu_custom_call.1} parent=1 // loop_footer_branch
      %20 = sbr.rel target = $region3
    $region8: #{tpu_custom_call.1} parent=1 // loop_exit
      _
    %1056 = vsyncpa [#allocation3], 1
    %s1057 = scalar_lea.sflag [#allocation3], 1
    %1058 = vsyncpa %s1057, 1
    %1059 = vsyncpa [#allocation6], 1
    %s1060 = scalar_lea.sflag [#allocation6], 1
    %1061 = vsyncpa %s1060, 1
    %1062 = vsyncpa [#allocation4], 1
    %s1063 = scalar_lea.sflag [#allocation4], 1
    %1064 = vsyncpa %s1063, 1

</llo_original>
